<compile_context>
chip_gen: v5e
topology: v5e:2x2
jax: 0.10.0
libtpu: 0.0.40
codegen_flags: <defaults>
</compile_context>

<pallas_src>
import jax
import jax.numpy as jnp
from jax.experimental import pallas as pl
from jax.experimental.pallas import tpu as pltpu


def _round_up(n, m):
    return ((n + m - 1) // m) * m


def _dqn_kernel(x_ref,
                w1_ref, b1_ref,
                w2_ref, b2_ref,
                w3_ref, b3_ref,
                w4_ref, b4_ref,
                q_ref):
    # Feature-major: x_ref is bf16 [state_dim, batch_tile]; weights are bf16 [out, in].
    # MXU matmuls accumulate in f32; bias-add / ReLU stay f32 on the VPU.
    x = x_ref[...]                                                      # bf16 [S,  Bt]
    h = jnp.dot(w1_ref[...], x, preferred_element_type=jnp.float32)    # [64, Bt]
    h = jnp.maximum(h + b1_ref[...], 0.0)
    h = jnp.dot(w2_ref[...], h.astype(jnp.bfloat16),
                preferred_element_type=jnp.float32)                    # [32, Bt]
    h = jnp.maximum(h + b2_ref[...], 0.0)
    h = jnp.dot(w3_ref[...], h.astype(jnp.bfloat16),
                preferred_element_type=jnp.float32)                    # [16, Bt]
    h = jnp.maximum(h + b3_ref[...], 0.0)
    q = jnp.dot(w4_ref[...], h.astype(jnp.bfloat16),
                preferred_element_type=jnp.float32)                    # [A_pad, Bt]
    q_ref[...] = (q + b4_ref[...]).astype(q_ref.dtype)                 # full 8-sublane store


def _resident_spec(shape):
    """Full-array block with a constant index_map: stays resident in VMEM."""
    return pl.BlockSpec(shape, lambda i: (0,) * len(shape))


def _kernel_params(params, a_pad):
    """Kernel-layout params: bf16 weights [out,in], f32 biases [out,1]; fc4 padded to a_pad rows."""
    out = []
    for i in range(1, 5):
        w = params[f"w{i}"].astype(jnp.bfloat16)
        b = params[f"b{i}"].reshape(-1, 1).astype(jnp.float32)
        if i == 4 and w.shape[0] < a_pad:
            w = jnp.zeros((a_pad, w.shape[1]), w.dtype).at[: w.shape[0]].set(w)
            b = jnp.zeros((a_pad, 1), b.dtype).at[: b.shape[0]].set(b)
        out += [w, b]
    return out


def dqn_forward(x, params, *, batch_tile=4096, feature_major_out=False):
    """x: [B, state_dim] f32; params: PyTorch-layout dict (w_i: [out,in], b_i: [out]).

    Returns Q [B, action_dim] (or [action_dim, B] if feature_major_out=True).
    """
    B, S = x.shape
    A = params["w4"].shape[0]
    A_pad = _round_up(A, 8)                      # 8-sublane-dense Q store

    # --- batch tiling ------------------------------------------------------
    bt_cap = max(128, _round_up(batch_tile, 128))
    B128 = _round_up(max(B, 1), 128)
    if B128 <= bt_cap:
        bt, n_tiles = B128, 1                    # whole batch in one grid step
    else:
        bt = bt_cap
        n_tiles = -(-B128 // bt)
        if n_tiles % 2:                          # even step count -> v7x megacore splits evenly
            n_tiles += 1                         # (one extra padded tile is microseconds of work)
    B_pad = n_tiles * bt

    # Feature-major bf16 input [S, B_pad]; cast fused into the pad+transpose so the
    # wrapper-side copy and the kernel's streamed x bytes are both halved.
    x_t = jnp.zeros((S, B_pad), jnp.bfloat16).at[:, :B].set(x.astype(jnp.bfloat16).T)

    kparams = _kernel_params(params, A_pad)

    in_specs = [pl.BlockSpec((S, bt), lambda i: (0, i))]          # streamed x tile
    in_specs += [_resident_spec(p.shape) for p in kparams]        # resident weights/biases
    out_spec = pl.BlockSpec((A_pad, bt), lambda i: (0, i))        # streamed q tile

    # --- cost / VMEM bookkeeping -------------------------------------------
    flops = 2 * B_pad * (S * 64 + 64 * 32 + 32 * 16 + 16 * A_pad)
    param_bytes = sum(int(p.size) * p.dtype.itemsize for p in kparams)
    bytes_accessed = x_t.size * 2 + A_pad * B_pad * 4 + param_bytes

    # Actual footprint: double-buffered x/q tiles + resident params + intermediates
    # (f32 + bf16 copies of the 64/32/16-wide activations).  ~3 MiB at bt=4096.
    act_bytes = (64 + 32 + 16) * bt * (4 + 2)
    io_bytes = 2 * (S * bt * 2 + A_pad * bt * 4)
    vmem_limit = min(64 << 20, max(8 << 20, 2 * (2 * param_bytes + act_bytes + io_bytes)))

    q_t = pl.pallas_call(
        _dqn_kernel,
        out_shape=jax.ShapeDtypeStruct((A_pad, B_pad), jnp.float32),
        grid=(n_tiles,),
        in_specs=in_specs,
        out_specs=out_spec,
        compiler_params=pltpu.CompilerParams(
            dimension_semantics=("parallel",),   # megacore sharding on v7x when n_tiles >= 2
            vmem_limit_bytes=vmem_limit,
        ),
        cost_estimate=pl.CostEstimate(
            flops=flops, transcendentals=0, bytes_accessed=bytes_accessed),
    )(x_t, *kparams)

    if feature_major_out:
        return q_t[:A, :B]                       # [A, B]: skips the output transpose
    return q_t[:A, :B].T                         # [B, A]: PyTorch module semantics


def init_params(key, state_dim, action_dim):
    """nn.Linear default init, PyTorch layout: w [out,in], b [out], U(+-1/sqrt(fan_in))."""
    dims = [(state_dim, 64), (64, 32), (32, 16), (16, action_dim)]
    params = {}
    for i, (fan_in, fan_out) in enumerate(dims, start=1):
        key, kw, kb = jax.random.split(key, 3)
        bound = 1.0 / (fan_in ** 0.5)
        params[f"w{i}"] = jax.random.uniform(
            kw, (fan_out, fan_in), jnp.float32, -bound, bound)
        params[f"b{i}"] = jax.random.uniform(
            kb, (fan_out,), jnp.float32, -bound, bound)
    return params


def _reference_f32(x, params):
    h = x
    for i in range(1, 4):
        h = jnp.maximum(h @ params[f"w{i}"].T + params[f"b{i}"], 0.0)
    return h @ params["w4"].T + params["b4"]


def _reference_matched(x, params):
    """Same math with the kernel's precision (bf16 matmul inputs, f32 accumulate)."""
    h = x.astype(jnp.bfloat16)
    for i in range(1, 4):
        w = params[f"w{i}"].astype(jnp.bfloat16)
        h = jnp.dot(h.astype(jnp.bfloat16), w.T, preferred_element_type=jnp.float32)
        h = jnp.maximum(h + params[f"b{i}"], 0.0)
    w = params["w4"].astype(jnp.bfloat16)
    return jnp.dot(h.astype(jnp.bfloat16), w.T,
                   preferred_element_type=jnp.float32) + params["b4"]


if __name__ == "__main__":
    key = jax.random.PRNGKey(0)
    batch, state_dim, action_dim = 8, 8, 4

    key, kx = jax.random.split(key)
    x = jax.random.normal(kx, (batch, state_dim), jnp.float32)
    params = init_params(key, state_dim, action_dim)

    # Small batch: single grid step.
    q = jax.block_until_ready(dqn_forward(x, params))
    assert q.shape == (batch, action_dim)
    q_ref_matched = _reference_matched(x, params)   # matched-precision contract
    q_ref_f32 = _reference_f32(x, params)           # original f32 module semantics
    assert jnp.allclose(q, q_ref_matched, atol=2e-3, rtol=2e-3), \
        "mismatch vs matched-precision reference"
    assert jnp.allclose(q, q_ref_f32, atol=5e-2, rtol=5e-2), \
        "mismatch vs f32 reference"

    # Multi-tile path (forces grid > 1 with an even step count) on a modest batch.
    key, kx2 = jax.random.split(key)
    x_big = jax.random.normal(kx2, (300, state_dim), jnp.float32)
    q_big = jax.block_until_ready(dqn_forward(x_big, params, batch_tile=128))
    assert q_big.shape == (300, action_dim)
    assert jnp.allclose(q_big, _reference_matched(x_big, params), atol=2e-3, rtol=2e-3), \
        "mismatch vs matched-precision reference (multi-tile)"

    print("KERNEL_OK")
</pallas_src>

<mosaic_0001>
module attributes {stable_mosaic.version = 11 : i64} {
  func.func @_dqn_kernel(%arg0: i32, %arg1: memref<8x128xbf16, #tpu.memory_space<vmem>>, %arg2: memref<64x8xbf16, #tpu.memory_space<vmem>>, %arg3: memref<64x1xf32, #tpu.memory_space<vmem>>, %arg4: memref<32x64xbf16, #tpu.memory_space<vmem>>, %arg5: memref<32x1xf32, #tpu.memory_space<vmem>>, %arg6: memref<16x32xbf16, #tpu.memory_space<vmem>>, %arg7: memref<16x1xf32, #tpu.memory_space<vmem>>, %arg8: memref<8x16xbf16, #tpu.memory_space<vmem>>, %arg9: memref<8x1xf32, #tpu.memory_space<vmem>>, %arg10: memref<8x128xf32, #tpu.memory_space<vmem>>) attributes {dimension_semantics = [#tpu.dimension_semantics<parallel>], iteration_bounds = array<i64: 1>, scalar_prefetch = 0 : i64, scratch_operands = 0 : i64, tpu.core_type = #tpu.core_type<tc>, window_params = [{transform_indices = @transform_0, window_bounds = array<i64: 8, 128>}, {pipeline_mode = #tpu.pipeline_mode<synchronous>, transform_indices = @transform_1, window_bounds = array<i64: 64, 8>}, {pipeline_mode = #tpu.pipeline_mode<synchronous>, transform_indices = @transform_2, window_bounds = array<i64: 64, 1>}, {pipeline_mode = #tpu.pipeline_mode<synchronous>, transform_indices = @transform_3, window_bounds = array<i64: 32, 64>}, {pipeline_mode = #tpu.pipeline_mode<synchronous>, transform_indices = @transform_4, window_bounds = array<i64: 32, 1>}, {pipeline_mode = #tpu.pipeline_mode<synchronous>, transform_indices = @transform_5, window_bounds = array<i64: 16, 32>}, {pipeline_mode = #tpu.pipeline_mode<synchronous>, transform_indices = @transform_6, window_bounds = array<i64: 16, 1>}, {pipeline_mode = #tpu.pipeline_mode<synchronous>, transform_indices = @transform_7, window_bounds = array<i64: 8, 16>}, {pipeline_mode = #tpu.pipeline_mode<synchronous>, transform_indices = @transform_8, window_bounds = array<i64: 8, 1>}, {transform_indices = @transform_9, window_bounds = array<i64: 8, 128>}]} {
    %c0 = arith.constant 0 : index
    %c0_0 = arith.constant 0 : index
    %0 = vector.load %arg1[%c0, %c0_0] : memref<8x128xbf16, #tpu.memory_space<vmem>>, vector<8x128xbf16>
    %c0_1 = arith.constant 0 : index
    %c0_2 = arith.constant 0 : index
    %1 = vector.load %arg2[%c0_1, %c0_2] : memref<64x8xbf16, #tpu.memory_space<vmem>>, vector<64x8xbf16>
    %cst = arith.constant dense<0.000000e+00> : vector<64x128xf32>
    %2 = tpu.matmul %1, %0, %cst {dimension_numbers = #tpu.dot_dimension_numbers<[1], [0], [0], [1], [0, 0, 1, 1], [], []>} : vector<64x8xbf16>, vector<8x128xbf16>, vector<64x128xf32> -> vector<64x128xf32>
    %c0_3 = arith.constant 0 : index
    %c0_4 = arith.constant 0 : index
    %3 = vector.load %arg3[%c0_3, %c0_4] : memref<64x1xf32, #tpu.memory_space<vmem>>, vector<64x1xf32>
    %4 = vector.broadcast %3 : vector<64x1xf32> to vector<64x128xf32>
    %5 = arith.addf %2, %4 : vector<64x128xf32>
    %cst_5 = arith.constant 0.000000e+00 : f32
    %6 = vector.broadcast %cst_5 : f32 to vector<64x128xf32>
    %7 = arith.maximumf %5, %6 : vector<64x128xf32>
    %c0_6 = arith.constant 0 : index
    %c0_7 = arith.constant 0 : index
    %8 = vector.load %arg4[%c0_6, %c0_7] : memref<32x64xbf16, #tpu.memory_space<vmem>>, vector<32x64xbf16>
    %9 = arith.truncf %7 : vector<64x128xf32> to vector<64x128xbf16>
    %cst_8 = arith.constant dense<0.000000e+00> : vector<32x128xf32>
    %10 = tpu.matmul %8, %9, %cst_8 {dimension_numbers = #tpu.dot_dimension_numbers<[1], [0], [0], [1], [0, 0, 1, 1], [], []>} : vector<32x64xbf16>, vector<64x128xbf16>, vector<32x128xf32> -> vector<32x128xf32>
    %c0_9 = arith.constant 0 : index
    %c0_10 = arith.constant 0 : index
    %11 = vector.load %arg5[%c0_9, %c0_10] : memref<32x1xf32, #tpu.memory_space<vmem>>, vector<32x1xf32>
    %12 = vector.broadcast %11 : vector<32x1xf32> to vector<32x128xf32>
    %13 = arith.addf %10, %12 : vector<32x128xf32>
    %cst_11 = arith.constant 0.000000e+00 : f32
    %14 = vector.broadcast %cst_11 : f32 to vector<32x128xf32>
    %15 = arith.maximumf %13, %14 : vector<32x128xf32>
    %c0_12 = arith.constant 0 : index
    %c0_13 = arith.constant 0 : index
    %16 = vector.load %arg6[%c0_12, %c0_13] : memref<16x32xbf16, #tpu.memory_space<vmem>>, vector<16x32xbf16>
    %17 = arith.truncf %15 : vector<32x128xf32> to vector<32x128xbf16>
    %cst_14 = arith.constant dense<0.000000e+00> : vector<16x128xf32>
    %18 = tpu.matmul %16, %17, %cst_14 {dimension_numbers = #tpu.dot_dimension_numbers<[1], [0], [0], [1], [0, 0, 1, 1], [], []>} : vector<16x32xbf16>, vector<32x128xbf16>, vector<16x128xf32> -> vector<16x128xf32>
    %c0_15 = arith.constant 0 : index
    %c0_16 = arith.constant 0 : index
    %19 = vector.load %arg7[%c0_15, %c0_16] : memref<16x1xf32, #tpu.memory_space<vmem>>, vector<16x1xf32>
    %20 = vector.broadcast %19 : vector<16x1xf32> to vector<16x128xf32>
    %21 = arith.addf %18, %20 : vector<16x128xf32>
    %cst_17 = arith.constant 0.000000e+00 : f32
    %22 = vector.broadcast %cst_17 : f32 to vector<16x128xf32>
    %23 = arith.maximumf %21, %22 : vector<16x128xf32>
    %c0_18 = arith.constant 0 : index
    %c0_19 = arith.constant 0 : index
    %24 = vector.load %arg8[%c0_18, %c0_19] : memref<8x16xbf16, #tpu.memory_space<vmem>>, vector<8x16xbf16>
    %25 = arith.truncf %23 : vector<16x128xf32> to vector<16x128xbf16>
    %cst_20 = arith.constant dense<0.000000e+00> : vector<8x128xf32>
    %26 = tpu.matmul %24, %25, %cst_20 {dimension_numbers = #tpu.dot_dimension_numbers<[1], [0], [0], [1], [0, 0, 1, 1], [], []>} : vector<8x16xbf16>, vector<16x128xbf16>, vector<8x128xf32> -> vector<8x128xf32>
    %c0_21 = arith.constant 0 : index
    %c0_22 = arith.constant 0 : index
    %27 = vector.load %arg9[%c0_21, %c0_22] : memref<8x1xf32, #tpu.memory_space<vmem>>, vector<8x1xf32>
    %28 = vector.broadcast %27 : vector<8x1xf32> to vector<8x128xf32>
    %29 = arith.addf %26, %28 : vector<8x128xf32>
    %c0_23 = arith.constant 0 : index
    %c0_24 = arith.constant 0 : index
    %30 = vector.load %arg10[%c0_23, %c0_24] : memref<8x128xf32, #tpu.memory_space<vmem>>, vector<8x128xf32>
    tpu.vector_store %arg10[%c0_23, %c0_24], %29 {strides = array<i32>} : memref<8x128xf32, #tpu.memory_space<vmem>>, vector<8x128xf32>,
    return
  }
  func.func @transform_0(%arg0: i32) -> (i32, i32) {
    %c0_i32 = arith.constant 0 : i32
    %c0_i32_0 = arith.constant 0 : i32
    return %c0_i32, %arg0 : i32, i32
  }
  func.func @transform_1(%arg0: i32) -> (i32, i32) {
    %c0_i32 = arith.constant 0 : i32
    %c0_i32_0 = arith.constant 0 : i32
    %c0_i32_1 = arith.constant 0 : i32
    return %c0_i32, %c0_i32_0 : i32, i32
  }
  func.func @transform_2(%arg0: i32) -> (i32, i32) {
    %c0_i32 = arith.constant 0 : i32
    %c0_i32_0 = arith.constant 0 : i32
    %c0_i32_1 = arith.constant 0 : i32
    return %c0_i32, %c0_i32_0 : i32, i32
  }
  func.func @transform_3(%arg0: i32) -> (i32, i32) {
    %c0_i32 = arith.constant 0 : i32
    %c0_i32_0 = arith.constant 0 : i32
    %c0_i32_1 = arith.constant 0 : i32
    return %c0_i32, %c0_i32_0 : i32, i32
  }
  func.func @transform_4(%arg0: i32) -> (i32, i32) {
    %c0_i32 = arith.constant 0 : i32
    %c0_i32_0 = arith.constant 0 : i32
    %c0_i32_1 = arith.constant 0 : i32
    return %c0_i32, %c0_i32_0 : i32, i32
  }
  func.func @transform_5(%arg0: i32) -> (i32, i32) {
    %c0_i32 = arith.constant 0 : i32
    %c0_i32_0 = arith.constant 0 : i32
    %c0_i32_1 = arith.constant 0 : i32
    return %c0_i32, %c0_i32_0 : i32, i32
  }
  func.func @transform_6(%arg0: i32) -> (i32, i32) {
    %c0_i32 = arith.constant 0 : i32
    %c0_i32_0 = arith.constant 0 : i32
    %c0_i32_1 = arith.constant 0 : i32
    return %c0_i32, %c0_i32_0 : i32, i32
  }
  func.func @transform_7(%arg0: i32) -> (i32, i32) {
    %c0_i32 = arith.constant 0 : i32
    %c0_i32_0 = arith.constant 0 : i32
    %c0_i32_1 = arith.constant 0 : i32
    return %c0_i32, %c0_i32_0 : i32, i32
  }
  func.func @transform_8(%arg0: i32) -> (i32, i32) {
    %c0_i32 = arith.constant 0 : i32
    %c0_i32_0 = arith.constant 0 : i32
    %c0_i32_1 = arith.constant 0 : i32
    return %c0_i32, %c0_i32_0 : i32, i32
  }
  func.func @transform_9(%arg0: i32) -> (i32, i32) {
    %c0_i32 = arith.constant 0 : i32
    %c0_i32_0 = arith.constant 0 : i32
    return %c0_i32, %arg0 : i32, i32
  }
}

</mosaic_0001>

<llo_original>
// kernel: tpu_custom_call.1
$region0: #{tpu_custom_call.1}
  #allocation0 [shape = 'u32[]', space=smem, size = 0x4, offset = 0x4, fixed_abs, tag = 'smem constant byte address 0x4 - core index']
  #allocation1 [shape = 'u32[72,128]{1,0:T(1,128)}', space=vmem, size = 0x9000, scoped, tag = 'internal scratch']
  %s0 = inlined_call_operand.vmem [shape: bf16[8,128], index: 0, kind: input, shape index: {}]
  %s1 = inlined_call_operand.vmem [shape: bf16[64,8], index: 1, kind: input, shape index: {}]
  %s2 = inlined_call_operand.vmem [shape: f32[64,1], index: 2, kind: input, shape index: {}]
  %s3 = inlined_call_operand.vmem [shape: bf16[32,64], index: 3, kind: input, shape index: {}]
  %s4 = inlined_call_operand.vmem [shape: f32[32,1], index: 4, kind: input, shape index: {}]
  %s5 = inlined_call_operand.vmem [shape: bf16[16,32], index: 5, kind: input, shape index: {}]
  %s6 = inlined_call_operand.vmem [shape: f32[16,1], index: 6, kind: input, shape index: {}]
  %s7 = inlined_call_operand.vmem [shape: bf16[8,16], index: 7, kind: input, shape index: {}]
  %s8 = inlined_call_operand.vmem [shape: f32[8,1], index: 8, kind: input, shape index: {}]
  %s9 = inlined_call_operand.hbm [shape: f32[8,128], index: 9, kind: output, shape index: {}]
  %s10 = sld [smem:[#allocation0]]
  $region46: #{tpu_custom_call.1} parent=0
    _
  %s12 = ssub.s32 1, %s10
  %s13 = scalar_select 0, %s12, %s10
  $region1: #{tpu_custom_call.1} parent=0
    #allocation2 [shape = 'u8[4096]{0}', space=vmem, size = 0x1000, scoped, tag = 'output window, operand 0, single buffered']
    #allocation3 [shape = 's32[1]{0}', space=sflag, size = 0x4, scoped, tag = 'scoped memory for tpu_custom_call.1']
    %14 = vsyncpa [#allocation3], 0
    // Predicated region
    $region2: #{tpu_custom_call.1} parent=1 // pred_check
      _
    $region3: #{tpu_custom_call.1} parent=1 // pred_check_branch
      %16 = sbr.rel (0) target = $region5
    $region4: #{tpu_custom_call.1} parent=1 // pred_region
      _
    $region5: #{tpu_custom_call.1} parent=1 // pred_fallthru
      _
    // Predicated region
    $region6: #{tpu_custom_call.1} parent=1 // pred_check
      _
    $region7: #{tpu_custom_call.1} parent=1 // pred_check_branch
      %18 = sbr.rel (0) target = $region9
    $region8: #{tpu_custom_call.1} parent=1 // pred_region
      _
    $region9: #{tpu_custom_call.1} parent=1 // pred_fallthru
      _
    // Predicated region
    $region10: #{tpu_custom_call.1} parent=1 // pred_check
      _
    $region11: #{tpu_custom_call.1} parent=1 // pred_check_branch
      %20 = sbr.rel (0) target = $region13
    $region12: #{tpu_custom_call.1} parent=1 // pred_region
      _
    $region13: #{tpu_custom_call.1} parent=1 // pred_fallthru
      _
    // Predicated region
    $region14: #{tpu_custom_call.1} parent=1 // pred_check
      _
    $region15: #{tpu_custom_call.1} parent=1 // pred_check_branch
      %22 = sbr.rel (0) target = $region17
    $region16: #{tpu_custom_call.1} parent=1 // pred_region
      _
    $region17: #{tpu_custom_call.1} parent=1 // pred_fallthru
      _
    // Predicated region
    $region18: #{tpu_custom_call.1} parent=1 // pred_check
      _
    $region19: #{tpu_custom_call.1} parent=1 // pred_check_branch
      %24 = sbr.rel (0) target = $region21
    $region20: #{tpu_custom_call.1} parent=1 // pred_region
      _
    $region21: #{tpu_custom_call.1} parent=1 // pred_fallthru
      _
    // Predicated region
    $region22: #{tpu_custom_call.1} parent=1 // pred_check
      _
    $region23: #{tpu_custom_call.1} parent=1 // pred_check_branch
      %26 = sbr.rel (0) target = $region25
    $region24: #{tpu_custom_call.1} parent=1 // pred_region
      _
    $region25: #{tpu_custom_call.1} parent=1 // pred_fallthru
      _
    // Predicated region
    $region26: #{tpu_custom_call.1} parent=1 // pred_check
      _
    $region27: #{tpu_custom_call.1} parent=1 // pred_check_branch
      %28 = sbr.rel (0) target = $region29
    $region28: #{tpu_custom_call.1} parent=1 // pred_region
      _
    $region29: #{tpu_custom_call.1} parent=1 // pred_fallthru
      _
    // Predicated region
    $region30: #{tpu_custom_call.1} parent=1 // pred_check
      _
    $region31: #{tpu_custom_call.1} parent=1 // pred_check_branch
      %30 = sbr.rel (0) target = $region33
    $region32: #{tpu_custom_call.1} parent=1 // pred_region
      _
    $region33: #{tpu_custom_call.1} parent=1 // pred_fallthru
      _
    // Predicated region
    $region34: #{tpu_custom_call.1} parent=1 // pred_check
      _
    $region35: #{tpu_custom_call.1} parent=1 // pred_check_branch
      %32 = sbr.rel (0) target = $region37
    $region36: #{tpu_custom_call.1} parent=1 // pred_region
      _
    $region37: #{tpu_custom_call.1} parent=1 // pred_fallthru
      _
    %v34 = vld [vmem:[%s0] sm:$0xf]
    %v35 = vld [vmem:[%s1] sm:$0xf]
    %v36 = vld [vmem:[%s1 + $0x4] sm:$0xf]
    %v37 = vld [vmem:[%s1 + $0x8] sm:$0xf]
    %v38 = vld [vmem:[%s1 + $0xc] sm:$0xf]
    %v39 = vld [vmem:[%s1 + $0x10] sm:$0xf]
    %v40 = vld [vmem:[%s1 + $0x14] sm:$0xf]
    %v41 = vld [vmem:[%s1 + $0x18] sm:$0xf]
    %v42 = vld [vmem:[%s1 + $0x1c] sm:$0xf]
    %v43 = vld [vmem:[%s2] sm:$0xff]
    %v44 = vld [vmem:[%s2 + $0x8] sm:$0xff]
    %v45 = vld [vmem:[%s2 + $0x10] sm:$0xff]
    %v46 = vld [vmem:[%s2 + $0x18] sm:$0xff]
    %v47 = vld [vmem:[%s2 + $0x20] sm:$0xff]
    %v48 = vld [vmem:[%s2 + $0x28] sm:$0xff]
    %v49 = vld [vmem:[%s2 + $0x30] sm:$0xff]
    %v50 = vld [vmem:[%s2 + $0x38] sm:$0xff]
    %52 = vset.pattern.permute.xlu0 0
    %53 = vperm.xlu0 %52, %v43
    %v54 = vpop.permute.xlu0 %53
    %57 = vset.pattern.permute.xlu0 0
    %58 = vperm.xlu0 %57, %v44
    %v59 = vpop.permute.xlu0 %58
    %62 = vset.pattern.permute.xlu0 0
    %63 = vperm.xlu0 %62, %v45
    %v64 = vpop.permute.xlu0 %63
    %67 = vset.pattern.permute.xlu0 0
    %68 = vperm.xlu0 %67, %v46
    %v69 = vpop.permute.xlu0 %68
    %72 = vset.pattern.permute.xlu0 0
    %73 = vperm.xlu0 %72, %v47
    %v74 = vpop.permute.xlu0 %73
    %77 = vset.pattern.permute.xlu0 0
    %78 = vperm.xlu0 %77, %v48
    %v79 = vpop.permute.xlu0 %78
    %82 = vset.pattern.permute.xlu0 0
    %83 = vperm.xlu0 %82, %v49
    %v84 = vpop.permute.xlu0 %83
    %87 = vset.pattern.permute.xlu0 0
    %88 = vperm.xlu0 %87, %v50
    %v89 = vpop.permute.xlu0 %88
    %v99 = vunpack.c.l.b16 %v35
    %v100 = vunpack.c.l.b16 %v36
    %v101 = vunpack.c.l.b16 %v37
    %v102 = vunpack.c.l.b16 %v38
    %v103 = vunpack.c.l.b16 %v39
    %v104 = vunpack.c.l.b16 %v40
    %v105 = vunpack.c.l.b16 %v41
    %v106 = vunpack.c.l.b16 %v42
    %v107 = vpack.c.b16 %v100, %v99
    %v108 = vpack.c.b16 %v102, %v101
    %v109 = vpack.c.b16 %v104, %v103
    %v110 = vpack.c.b16 %v106, %v105
    %vm111 = vcmask 64512
    %v113 = vsel %vm111, %v107, 0
    %v116 = vsel %vm111, %v108, 0
    %v119 = vsel %vm111, %v109, 0
    %v122 = vsel %vm111, %v110, 0
    %vm124 = vcmask 1043456
    %v126 = vsel %vm124, %v34, 0
    %128 = vmatpush.bf16.msra.mxu0 0
    %129 = vmatpush.bf16.msra.mxu0 0
    %130 = vmatpush.bf16.msra.mxu0 0
    %131 = vmatpush.bf16.msra.mxu0 0
    %132 = vmatpush.bf16.msra.mxu0 0
    %133 = vmatpush.bf16.msra.mxu0 0
    %134 = vmatpush.bf16.msra.mxu0 0
    %135 = vmatpush.bf16.msra.mxu0 %v126
    %136 = vmatmul.bf16.gmra.mxu0 %v113
    %v137 = vpop.f32.mrf.mxu0
    %v138 = vadd.f32 %v54, %v137
    %v139 = vpop.f32.mrf.mxu0
    %v140 = vadd.f32 %v59, %v139
    %141 = vmatmul.bf16.gmra.mxu0 %v116
    %v142 = vpop.f32.mrf.mxu0
    %v143 = vadd.f32 %v64, %v142
    %v144 = vpop.f32.mrf.mxu0
    %v145 = vadd.f32 %v69, %v144
    %146 = vmatmul.bf16.gmra.mxu0 %v119
    %v147 = vpop.f32.mrf.mxu0
    %v148 = vadd.f32 %v74, %v147
    %v149 = vpop.f32.mrf.mxu0
    %v150 = vadd.f32 %v79, %v149
    %151 = vmatmul.bf16.gmra.mxu0 %v122
    %v152 = vpop.f32.mrf.mxu0
    %v153 = vadd.f32 %v84, %v152
    %v154 = vpop.f32.mrf.mxu0
    %v155 = vadd.f32 %v89, %v154
    %156 = vdwg.mxu0
    %v157 = vmax.f32 %v138, 0.0
    %v158 = vmax.f32 %v140, 0.0
    %v159 = vmax.f32 %v143, 0.0
    %v160 = vmax.f32 %v145, 0.0
    %v161 = vmax.f32 %v148, 0.0
    %v162 = vmax.f32 %v150, 0.0
    %v163 = vmax.f32 %v153, 0.0
    %v164 = vmax.f32 %v155, 0.0
    %v165 = vld [vmem:[%s3] sm:$0xf]
    %v166 = vld [vmem:[%s3 + $0x4] sm:$0xf]
    %v167 = vld [vmem:[%s3 + $0x8] sm:$0xf]
    %v168 = vld [vmem:[%s3 + $0xc] sm:$0xf]
    %v169 = vpack.c.bf16 %v158, %v157
    %v170 = vpack.c.bf16 %v160, %v159
    %v171 = vpack.c.bf16 %v162, %v161
    %v172 = vpack.c.bf16 %v164, %v163
    %v173 = vld [vmem:[%s4] sm:$0xff]
    %v174 = vld [vmem:[%s4 + $0x8] sm:$0xff]
    %v175 = vld [vmem:[%s4 + $0x10] sm:$0xff]
    %v176 = vld [vmem:[%s4 + $0x18] sm:$0xff]
    %178 = vset.pattern.permute.xlu0 0
    %179 = vperm.xlu0 %178, %v173
    %v180 = vpop.permute.xlu0 %179
    %183 = vset.pattern.permute.xlu0 0
    %184 = vperm.xlu0 %183, %v174
    %v185 = vpop.permute.xlu0 %184
    %188 = vset.pattern.permute.xlu0 0
    %189 = vperm.xlu0 %188, %v175
    %v190 = vpop.permute.xlu0 %189
    %193 = vset.pattern.permute.xlu0 0
    %194 = vperm.xlu0 %193, %v176
    %v195 = vpop.permute.xlu0 %194
    %v201 = vunpack.c.l.b16 %v165
    %v202 = vunpack.c.l.b16 %v166
    %v203 = vunpack.c.l.b16 %v167
    %v204 = vunpack.c.l.b16 %v168
    %v205 = vpack.c.b16 %v202, %v201
    %v206 = vpack.c.b16 %v204, %v203
    %vm207 = vcmask 523264
    %v209 = vsel %vm207, %v205, 0
    %v212 = vsel %vm207, %v206, 0
    %214 = vmatpush.bf16.msra.mxu0 0
    %215 = vmatpush.bf16.msra.mxu0 0
    %216 = vmatpush.bf16.msra.mxu0 0
    %217 = vmatpush.bf16.msra.mxu0 0
    %218 = vmatpush.bf16.msra.mxu0 %v172
    %219 = vmatpush.bf16.msra.mxu0 %v171
    %220 = vmatpush.bf16.msra.mxu0 %v170
    %221 = vmatpush.bf16.msra.mxu0 %v169
    %222 = vmatmul.bf16.gmra.mxu0 %v209
    %v223 = vpop.f32.mrf.mxu0
    %v224 = vadd.f32 %v180, %v223
    %v225 = vpop.f32.mrf.mxu0
    %v226 = vadd.f32 %v185, %v225
    %227 = vmatmul.bf16.gmra.mxu0 %v212
    %v228 = vpop.f32.mrf.mxu0
    %v229 = vadd.f32 %v190, %v228
    %v230 = vpop.f32.mrf.mxu0
    %v231 = vadd.f32 %v195, %v230
    %232 = vdwg.mxu0
    %v233 = vmax.f32 %v224, 0.0
    %v234 = vmax.f32 %v226, 0.0
    %v235 = vmax.f32 %v229, 0.0
    %v236 = vmax.f32 %v231, 0.0
    %v237 = vld [vmem:[%s5] sm:$0xf]
    %v238 = vld [vmem:[%s5 + $0x4] sm:$0xf]
    %v239 = vpack.c.bf16 %v234, %v233
    %v240 = vpack.c.bf16 %v236, %v235
    %v241 = vld [vmem:[%s6] sm:$0xff]
    %v242 = vld [vmem:[%s6 + $0x8] sm:$0xff]
    %244 = vset.pattern.permute.xlu0 0
    %245 = vperm.xlu0 %244, %v241
    %v246 = vpop.permute.xlu0 %245
    %249 = vset.pattern.permute.xlu0 0
    %250 = vperm.xlu0 %249, %v242
    %v251 = vpop.permute.xlu0 %250
    %v255 = vunpack.c.l.b16 %v237
    %v256 = vunpack.c.l.b16 %v238
    %v257 = vpack.c.b16 %v256, %v255
    %vm258 = vcmask 261120
    %v260 = vsel %vm258, %v257, 0
    %262 = vmatpush.bf16.msra.mxu0 0
    %263 = vmatpush.bf16.msra.mxu0 0
    %264 = vmatpush.bf16.msra.mxu0 0
    %265 = vmatpush.bf16.msra.mxu0 0
    %266 = vmatpush.bf16.msra.mxu0 0
    %267 = vmatpush.bf16.msra.mxu0 0
    %268 = vmatpush.bf16.msra.mxu0 %v240
    %269 = vmatpush.bf16.msra.mxu0 %v239
    %270 = vmatmul.bf16.gmra.mxu0 %v260
    %v271 = vpop.f32.mrf.mxu0
    %v272 = vadd.f32 %v246, %v271
    %v273 = vpop.f32.mrf.mxu0
    %v274 = vadd.f32 %v251, %v273
    %275 = vdwg.mxu0
    %v276 = vmax.f32 %v272, 0.0
    %v277 = vmax.f32 %v274, 0.0
    %v278 = vld [vmem:[%s7] sm:$0xf]
    %v279 = vpack.c.bf16 %v277, %v276
    %v280 = vld [vmem:[%s8] sm:$0xff]
    %282 = vset.pattern.permute.xlu0 0
    %283 = vperm.xlu0 %282, %v280
    %v284 = vpop.permute.xlu0 %283
    %vm286 = vcmask 130048
    %v288 = vsel %vm286, %v278, 0
    %290 = vmatpush.bf16.msra.mxu0 0
    %291 = vmatpush.bf16.msra.mxu0 0
    %292 = vmatpush.bf16.msra.mxu0 0
    %293 = vmatpush.bf16.msra.mxu0 0
    %294 = vmatpush.bf16.msra.mxu0 0
    %295 = vmatpush.bf16.msra.mxu0 0
    %296 = vmatpush.bf16.msra.mxu0 0
    %297 = vmatpush.bf16.msra.mxu0 %v279
    %298 = vmatmul.bf16.gmra.mxu0 %v288
    %v299 = vpop.f32.mrf.mxu0
    %v300 = vadd.f32 %v284, %v299
    %v301 = vpop.f32.mrf.mxu0
    %302 = vdwg.mxu0
    %303 = vst [vmem:[#allocation2] sm:$0xff] %v300
    // Predicated region
    $region38: #{tpu_custom_call.1} parent=1 // pred_check
      _
    $region39: #{tpu_custom_call.1} parent=1 // pred_check_branch
      %305 = sbr.rel (0) target = $region41
    $region40: #{tpu_custom_call.1} parent=1 // pred_region
      %307 = vsyncadd [#allocation3], 0
      %s309 = sshll.u32 [#allocation2], 4
      %s310 = int_to_ptr.vmem [resolvable:$true] %s309
      %s311 = sshll.u32 %s9, 4
      %s312 = int_to_ptr.hbm [resolvable:$true] %s311
      %314 = dma.vmem_to_hbm [thread:$0]  %s310, 128, %s312, [#allocation3]
    $region41: #{tpu_custom_call.1} parent=1 // pred_fallthru
      _
    // Predicated region
    $region42: #{tpu_custom_call.1} parent=1 // pred_check
      _
    $region43: #{tpu_custom_call.1} parent=1 // pred_check_branch
      %316 = sbr.rel (0) target = $region45
    $region44: #{tpu_custom_call.1} parent=1 // pred_region
      %318 = dma.done [#allocation3], 128
    $region45: #{tpu_custom_call.1} parent=1 // pred_fallthru
      _
    %319 = vsyncpa [#allocation3], 1

</llo_original>
